<compile_context>
chip_gen: v7x
topology: tpu7x:2x2x1
jax: 0.10.0
libtpu: 0.0.40
codegen_flags: <defaults>
</compile_context>

<pallas_src>
from functools import partial

import jax
import jax.numpy as jnp
from jax.experimental import pallas as pl
from jax.experimental.pallas import tpu as pltpu

NUM_CLASSES = 5          # len(label_dict_from_config_file(...)) -- synthetic choice
IN_FEATURES = 63
IN_PAD = 64              # feature dim padded to a bf16-friendly contraction width
HIDDEN = 128
C_PAD = 128              # padded class width (lane-dense output slab)
BN_EPS = 1e-5
TILE_B = 2048            # max batch rows per grid step (multiple of 16 for bf16 packing)
MIN_STEPS = 4            # target >=4 grid steps on large batches (v7x: 2 TCs)


def _mlp_kernel(x_ref,
                w1_ref, w2_ref, w3_ref, w4_ref, w5_ref,
                bias_ref,
                out_ref):
    """Fused MLP forward for one batch tile: 5 bf16 matmuls, f32 accumulation.

    x_ref:    (tile, 64)  bf16, feature 63 zero-padded to 64 (done in wrapper)
    w*_ref:   bf16 weights, VMEM-resident (constant index maps)
    bias_ref: (8, 128) f32 bias table, rows 0..4 = b1, b2(BN-folded), b3, b4, b5(pad)
    out_ref:  (tile, 128) bf16 lane-dense logits slab (classes 0..4 valid)
    """
    x = x_ref[...]                     # already bf16
    bias = bias_ref[...]               # (8, 128) f32

    # Linear(63 -> 128) + ReLU      (padded input column / weight row are zero: exact)
    h = jnp.dot(x, w1_ref[...], preferred_element_type=jnp.float32) + bias[0:1, :]
    h = jnp.maximum(h, 0.0).astype(jnp.bfloat16)
    # BatchNorm1d(128) eval-mode affine is pre-folded into w2/b2 (exact).

    # Linear(128 -> 128) + ReLU     (Dropout p=0.4 is identity in eval mode)
    h = jnp.dot(h, w2_ref[...], preferred_element_type=jnp.float32) + bias[1:2, :]
    h = jnp.maximum(h, 0.0).astype(jnp.bfloat16)

    # Linear(128 -> 128) + ReLU     (Dropout p=0.4 is identity in eval mode)
    h = jnp.dot(h, w3_ref[...], preferred_element_type=jnp.float32) + bias[2:3, :]
    h = jnp.maximum(h, 0.0).astype(jnp.bfloat16)

    # Linear(128 -> 128) + ReLU     (Dropout p=0.6 is identity in eval mode)
    h = jnp.dot(h, w4_ref[...], preferred_element_type=jnp.float32) + bias[3:4, :]
    h = jnp.maximum(h, 0.0).astype(jnp.bfloat16)

    # Linear(128 -> NUM_CLASSES), class dim zero-padded to 128 lanes
    logits = jnp.dot(h, w5_ref[...], preferred_element_type=jnp.float32) + bias[4:5, :]
    out_ref[...] = logits.astype(out_ref.dtype)
    # TODO(synk): the module's predict() applies Softmax/argmax downstream; the
    # forward() spec returns raw logits, so that epilogue is not fused here.


def _choose_tile(batch):
    """Batch tile: small batches get one minimal tile; big batches get >=MIN_STEPS tiles."""
    b16 = ((batch + 15) // 16) * 16
    if b16 <= TILE_B // MIN_STEPS:      # small batch: single tile, no wasted padding
        return b16
    target = ((b16 + MIN_STEPS - 1) // MIN_STEPS + 15) // 16 * 16
    return min(TILE_B, target)


@partial(jax.jit, static_argnames=("return_padded",))
def mlp_forward(x, kparams, return_padded=False):
    """x: (B, 63) float32.

    Returns bf16 logits (B, NUM_CLASSES), or the raw lane-dense (b_pad, 128)
    bf16 slab when return_padded=True (lets a fused consumer skip the re-read).
    """
    B = x.shape[0]
    tile = _choose_tile(B)
    b_pad = ((B + tile - 1) // tile) * tile

    # One wrapper-side pad+cast: batch -> b_pad rows, features 63 -> 64, f32 -> bf16.
    x = jnp.pad(x, ((0, b_pad - B), (0, IN_PAD - IN_FEATURES))).astype(jnp.bfloat16)

    w1, w2, w3, w4, w5, bias_tbl = kparams

    const = lambda a: pl.BlockSpec(a.shape, lambda i: (0, 0))   # VMEM-resident operand

    out = pl.pallas_call(
        _mlp_kernel,
        out_shape=jax.ShapeDtypeStruct((b_pad, C_PAD), jnp.bfloat16),
        grid=(b_pad // tile,),
        in_specs=[pl.BlockSpec((tile, IN_PAD), lambda i: (i, 0)),
                  const(w1), const(w2), const(w3), const(w4), const(w5),
                  const(bias_tbl)],
        out_specs=pl.BlockSpec((tile, C_PAD), lambda i: (i, 0)),
        compiler_params=pltpu.CompilerParams(
            dimension_semantics=("parallel",),
            vmem_limit_bytes=32 * 1024 * 1024),
    )(x, w1, w2, w3, w4, w5, bias_tbl)

    if return_padded:
        return out                      # padded rows hold bias-only logits
    return out[:B, :NUM_CLASSES]


def init_params(key):
    """Raw f32 parameters matching the PyTorch module (torch-style init)."""
    keys = jax.random.split(key, 10)

    def linear(kw, kb, fan_in, fan_out):
        bound = fan_in ** -0.5   # uniform(-1/sqrt(fan_in), 1/sqrt(fan_in))
        w = jax.random.uniform(kw, (fan_in, fan_out), jnp.float32, -bound, bound)
        b = jax.random.uniform(kb, (fan_out,), jnp.float32, -bound, bound)
        return w, b

    w1, b1 = linear(keys[0], keys[1], IN_FEATURES, HIDDEN)
    w2, b2 = linear(keys[2], keys[3], HIDDEN, HIDDEN)
    w3, b3 = linear(keys[4], keys[5], HIDDEN, HIDDEN)
    w4, b4 = linear(keys[6], keys[7], HIDDEN, HIDDEN)
    w5, b5 = linear(keys[8], keys[9], HIDDEN, NUM_CLASSES)

    # BatchNorm1d(128), eval mode with default buffers.
    return dict(
        w1=w1, b1=b1, w2=w2, b2=b2, w3=w3, b3=b3, w4=w4, b4=b4, w5=w5, b5=b5,
        gamma=jnp.ones((HIDDEN,), jnp.float32),
        beta=jnp.zeros((HIDDEN,), jnp.float32),
        running_mean=jnp.zeros((HIDDEN,), jnp.float32),
        running_var=jnp.ones((HIDDEN,), jnp.float32),
    )


def pack_kernel_params(p):
    """One-time prep outside the hot path.

    * Fold eval-mode BN exactly into Linear #2: w2' = scale[:,None]*w2, b2' = shift@w2+b2.
    * Pad w1's contraction dim 63 -> 64 (zero row) and w5's class dim 5 -> 128 (zero cols).
    * Cast weights to bf16; pack the five f32 bias rows into one (8,128) f32 table.
    """
    scale = p["gamma"] / jnp.sqrt(p["running_var"] + BN_EPS)
    shift = p["beta"] - p["running_mean"] * scale
    w2f = scale[:, None] * p["w2"]
    b2f = shift @ p["w2"] + p["b2"]

    w1p = jnp.zeros((IN_PAD, HIDDEN), jnp.float32).at[:IN_FEATURES, :].set(p["w1"])
    w5p = jnp.zeros((HIDDEN, C_PAD), jnp.float32).at[:, :NUM_CLASSES].set(p["w5"])
    b5p = jnp.zeros((C_PAD,), jnp.float32).at[:NUM_CLASSES].set(p["b5"])

    bias_tbl = jnp.zeros((8, C_PAD), jnp.float32)
    bias_tbl = bias_tbl.at[0].set(p["b1"])
    bias_tbl = bias_tbl.at[1].set(b2f)
    bias_tbl = bias_tbl.at[2].set(p["b3"])
    bias_tbl = bias_tbl.at[3].set(p["b4"])
    bias_tbl = bias_tbl.at[4].set(b5p)

    bf = lambda a: a.astype(jnp.bfloat16)
    return (bf(w1p), bf(w2f), bf(p["w3"]), bf(p["w4"]), bf(w5p), bias_tbl)


def _reference(x, p):
    """Pure-JAX f32 reference of the PyTorch forward (eval mode)."""
    scale = p["gamma"] / jnp.sqrt(p["running_var"] + BN_EPS)
    shift = p["beta"] - p["running_mean"] * scale
    h = jnp.maximum(x @ p["w1"] + p["b1"], 0.0)
    h = h * scale + shift
    h = jnp.maximum(h @ p["w2"] + p["b2"], 0.0)
    h = jnp.maximum(h @ p["w3"] + p["b3"], 0.0)
    h = jnp.maximum(h @ p["w4"] + p["b4"], 0.0)
    return h @ p["w5"] + p["b5"]


if __name__ == "__main__":
    key = jax.random.PRNGKey(0)
    k_param, k_x, k_x2 = jax.random.split(key, 3)

    raw_params = init_params(k_param)
    kparams = pack_kernel_params(raw_params)   # one-time prep, outside the hot path

    # Input = flattened 21 hand landmarks x (x, y, z) = 63 features.
    B = 8
    x = jax.random.normal(k_x, (B, IN_FEATURES), jnp.float32)

    logits = mlp_forward(x, kparams)
    jax.block_until_ready(logits)

    ref = _reference(x, raw_params)
    assert logits.shape == (B, NUM_CLASSES)
    assert jnp.allclose(logits.astype(jnp.float32), ref, atol=5e-2, rtol=5e-2)

    # Second check: a batch large enough to exercise the multi-step ("parallel") grid
    # and the batch-padding path.
    B2 = 1000
    x2 = jax.random.normal(k_x2, (B2, IN_FEATURES), jnp.float32)
    logits2 = mlp_forward(x2, kparams)
    jax.block_until_ready(logits2)
    ref2 = _reference(x2, raw_params)
    assert logits2.shape == (B2, NUM_CLASSES)
    assert jnp.allclose(logits2.astype(jnp.float32), ref2, atol=5e-2, rtol=5e-2)

    # TODO(synk): Dropout layers are stochastic in training mode; eval-mode
    # identity semantics are implemented here.
    print("KERNEL_OK")
</pallas_src>

<mosaic_0001>
module attributes {stable_mosaic.version = 11 : i64} {
  func.func @_mlp_kernel(%arg0: i32, %arg1: memref<16x64xbf16, #tpu.memory_space<vmem>>, %arg2: memref<64x128xbf16, #tpu.memory_space<vmem>>, %arg3: memref<128x128xbf16, #tpu.memory_space<vmem>>, %arg4: memref<128x128xbf16, #tpu.memory_space<vmem>>, %arg5: memref<128x128xbf16, #tpu.memory_space<vmem>>, %arg6: memref<128x128xbf16, #tpu.memory_space<vmem>>, %arg7: memref<8x128xf32, #tpu.memory_space<vmem>>, %arg8: memref<16x128xbf16, #tpu.memory_space<vmem>>) attributes {dimension_semantics = [#tpu.dimension_semantics<parallel>], iteration_bounds = array<i64: 1>, scalar_prefetch = 0 : i64, scratch_operands = 0 : i64, tpu.core_type = #tpu.core_type<tc>, window_params = [{transform_indices = @transform_0, window_bounds = array<i64: 16, 64>}, {pipeline_mode = #tpu.pipeline_mode<synchronous>, transform_indices = @transform_1, window_bounds = array<i64: 64, 128>}, {pipeline_mode = #tpu.pipeline_mode<synchronous>, transform_indices = @transform_2, window_bounds = array<i64: 128, 128>}, {pipeline_mode = #tpu.pipeline_mode<synchronous>, transform_indices = @transform_3, window_bounds = array<i64: 128, 128>}, {pipeline_mode = #tpu.pipeline_mode<synchronous>, transform_indices = @transform_4, window_bounds = array<i64: 128, 128>}, {pipeline_mode = #tpu.pipeline_mode<synchronous>, transform_indices = @transform_5, window_bounds = array<i64: 128, 128>}, {pipeline_mode = #tpu.pipeline_mode<synchronous>, transform_indices = @transform_6, window_bounds = array<i64: 8, 128>}, {transform_indices = @transform_7, window_bounds = array<i64: 16, 128>}]} {
    %c0 = arith.constant 0 : index
    %c0_0 = arith.constant 0 : index
    %0 = vector.load %arg1[%c0, %c0_0] : memref<16x64xbf16, #tpu.memory_space<vmem>>, vector<16x64xbf16>
    %c0_1 = arith.constant 0 : index
    %c0_2 = arith.constant 0 : index
    %1 = vector.load %arg7[%c0_1, %c0_2] : memref<8x128xf32, #tpu.memory_space<vmem>>, vector<8x128xf32>
    %c0_3 = arith.constant 0 : index
    %c0_4 = arith.constant 0 : index
    %2 = vector.load %arg2[%c0_3, %c0_4] : memref<64x128xbf16, #tpu.memory_space<vmem>>, vector<64x128xbf16>
    %cst = arith.constant dense<0.000000e+00> : vector<16x128xf32>
    %3 = tpu.matmul %0, %2, %cst {dimension_numbers = #tpu.dot_dimension_numbers<[1], [0], [0], [1], [0, 0, 1, 1], [], []>} : vector<16x64xbf16>, vector<64x128xbf16>, vector<16x128xf32> -> vector<16x128xf32>
    %4 = vector.extract_strided_slice %1 {offsets = [0, 0], sizes = [1, 128], strides = [1, 1]} : vector<8x128xf32> to vector<1x128xf32>
    %5 = vector.broadcast %4 : vector<1x128xf32> to vector<16x128xf32>
    %6 = arith.addf %3, %5 : vector<16x128xf32>
    %cst_5 = arith.constant 0.000000e+00 : f32
    %7 = vector.broadcast %cst_5 : f32 to vector<16x128xf32>
    %8 = arith.maximumf %6, %7 : vector<16x128xf32>
    %9 = arith.truncf %8 : vector<16x128xf32> to vector<16x128xbf16>
    %c0_6 = arith.constant 0 : index
    %c0_7 = arith.constant 0 : index
    %10 = vector.load %arg3[%c0_6, %c0_7] : memref<128x128xbf16, #tpu.memory_space<vmem>>, vector<128x128xbf16>
    %cst_8 = arith.constant dense<0.000000e+00> : vector<16x128xf32>
    %11 = tpu.matmul %9, %10, %cst_8 {dimension_numbers = #tpu.dot_dimension_numbers<[1], [0], [0], [1], [0, 0, 1, 1], [], []>} : vector<16x128xbf16>, vector<128x128xbf16>, vector<16x128xf32> -> vector<16x128xf32>
    %12 = vector.extract_strided_slice %1 {offsets = [1, 0], sizes = [1, 128], strides = [1, 1]} : vector<8x128xf32> to vector<1x128xf32>
    %13 = vector.broadcast %12 : vector<1x128xf32> to vector<16x128xf32>
    %14 = arith.addf %11, %13 : vector<16x128xf32>
    %cst_9 = arith.constant 0.000000e+00 : f32
    %15 = vector.broadcast %cst_9 : f32 to vector<16x128xf32>
    %16 = arith.maximumf %14, %15 : vector<16x128xf32>
    %17 = arith.truncf %16 : vector<16x128xf32> to vector<16x128xbf16>
    %c0_10 = arith.constant 0 : index
    %c0_11 = arith.constant 0 : index
    %18 = vector.load %arg4[%c0_10, %c0_11] : memref<128x128xbf16, #tpu.memory_space<vmem>>, vector<128x128xbf16>
    %cst_12 = arith.constant dense<0.000000e+00> : vector<16x128xf32>
    %19 = tpu.matmul %17, %18, %cst_12 {dimension_numbers = #tpu.dot_dimension_numbers<[1], [0], [0], [1], [0, 0, 1, 1], [], []>} : vector<16x128xbf16>, vector<128x128xbf16>, vector<16x128xf32> -> vector<16x128xf32>
    %20 = vector.extract_strided_slice %1 {offsets = [2, 0], sizes = [1, 128], strides = [1, 1]} : vector<8x128xf32> to vector<1x128xf32>
    %21 = vector.broadcast %20 : vector<1x128xf32> to vector<16x128xf32>
    %22 = arith.addf %19, %21 : vector<16x128xf32>
    %cst_13 = arith.constant 0.000000e+00 : f32
    %23 = vector.broadcast %cst_13 : f32 to vector<16x128xf32>
    %24 = arith.maximumf %22, %23 : vector<16x128xf32>
    %25 = arith.truncf %24 : vector<16x128xf32> to vector<16x128xbf16>
    %c0_14 = arith.constant 0 : index
    %c0_15 = arith.constant 0 : index
    %26 = vector.load %arg5[%c0_14, %c0_15] : memref<128x128xbf16, #tpu.memory_space<vmem>>, vector<128x128xbf16>
    %cst_16 = arith.constant dense<0.000000e+00> : vector<16x128xf32>
    %27 = tpu.matmul %25, %26, %cst_16 {dimension_numbers = #tpu.dot_dimension_numbers<[1], [0], [0], [1], [0, 0, 1, 1], [], []>} : vector<16x128xbf16>, vector<128x128xbf16>, vector<16x128xf32> -> vector<16x128xf32>
    %28 = vector.extract_strided_slice %1 {offsets = [3, 0], sizes = [1, 128], strides = [1, 1]} : vector<8x128xf32> to vector<1x128xf32>
    %29 = vector.broadcast %28 : vector<1x128xf32> to vector<16x128xf32>
    %30 = arith.addf %27, %29 : vector<16x128xf32>
    %cst_17 = arith.constant 0.000000e+00 : f32
    %31 = vector.broadcast %cst_17 : f32 to vector<16x128xf32>
    %32 = arith.maximumf %30, %31 : vector<16x128xf32>
    %33 = arith.truncf %32 : vector<16x128xf32> to vector<16x128xbf16>
    %c0_18 = arith.constant 0 : index
    %c0_19 = arith.constant 0 : index
    %34 = vector.load %arg6[%c0_18, %c0_19] : memref<128x128xbf16, #tpu.memory_space<vmem>>, vector<128x128xbf16>
    %cst_20 = arith.constant dense<0.000000e+00> : vector<16x128xf32>
    %35 = tpu.matmul %33, %34, %cst_20 {dimension_numbers = #tpu.dot_dimension_numbers<[1], [0], [0], [1], [0, 0, 1, 1], [], []>} : vector<16x128xbf16>, vector<128x128xbf16>, vector<16x128xf32> -> vector<16x128xf32>
    %36 = vector.extract_strided_slice %1 {offsets = [4, 0], sizes = [1, 128], strides = [1, 1]} : vector<8x128xf32> to vector<1x128xf32>
    %37 = vector.broadcast %36 : vector<1x128xf32> to vector<16x128xf32>
    %38 = arith.addf %35, %37 : vector<16x128xf32>
    %39 = arith.truncf %38 : vector<16x128xf32> to vector<16x128xbf16>
    %c0_21 = arith.constant 0 : index
    %c0_22 = arith.constant 0 : index
    %40 = vector.load %arg8[%c0_21, %c0_22] : memref<16x128xbf16, #tpu.memory_space<vmem>>, vector<16x128xbf16>
    tpu.vector_store %arg8[%c0_21, %c0_22], %39 {strides = array<i32>} : memref<16x128xbf16, #tpu.memory_space<vmem>>, vector<16x128xbf16>,
    return
  }
  func.func @transform_0(%arg0: i32) -> (i32, i32) {
    %c0_i32 = arith.constant 0 : i32
    %c0_i32_0 = arith.constant 0 : i32
    return %arg0, %c0_i32 : i32, i32
  }
  func.func @transform_1(%arg0: i32) -> (i32, i32) {
    %c0_i32 = arith.constant 0 : i32
    %c0_i32_0 = arith.constant 0 : i32
    %c0_i32_1 = arith.constant 0 : i32
    return %c0_i32, %c0_i32_0 : i32, i32
  }
  func.func @transform_2(%arg0: i32) -> (i32, i32) {
    %c0_i32 = arith.constant 0 : i32
    %c0_i32_0 = arith.constant 0 : i32
    %c0_i32_1 = arith.constant 0 : i32
    return %c0_i32, %c0_i32_0 : i32, i32
  }
  func.func @transform_3(%arg0: i32) -> (i32, i32) {
    %c0_i32 = arith.constant 0 : i32
    %c0_i32_0 = arith.constant 0 : i32
    %c0_i32_1 = arith.constant 0 : i32
    return %c0_i32, %c0_i32_0 : i32, i32
  }
  func.func @transform_4(%arg0: i32) -> (i32, i32) {
    %c0_i32 = arith.constant 0 : i32
    %c0_i32_0 = arith.constant 0 : i32
    %c0_i32_1 = arith.constant 0 : i32
    return %c0_i32, %c0_i32_0 : i32, i32
  }
  func.func @transform_5(%arg0: i32) -> (i32, i32) {
    %c0_i32 = arith.constant 0 : i32
    %c0_i32_0 = arith.constant 0 : i32
    %c0_i32_1 = arith.constant 0 : i32
    return %c0_i32, %c0_i32_0 : i32, i32
  }
  func.func @transform_6(%arg0: i32) -> (i32, i32) {
    %c0_i32 = arith.constant 0 : i32
    %c0_i32_0 = arith.constant 0 : i32
    %c0_i32_1 = arith.constant 0 : i32
    return %c0_i32, %c0_i32_0 : i32, i32
  }
  func.func @transform_7(%arg0: i32) -> (i32, i32) {
    %c0_i32 = arith.constant 0 : i32
    %c0_i32_0 = arith.constant 0 : i32
    return %arg0, %c0_i32 : i32, i32
  }
}

</mosaic_0001>

<llo_original>
// kernel: mlp_forward.1
$region0: #{mlp_forward.1}
  #allocation0 [shape = 'u32[]', space=smem, size = 0x4, offset = 0x4, fixed_abs, tag = 'smem constant byte address 0x4 - core index']
  #allocation1 [shape = 'u32[144,128]{1,0:T(1,128)}', space=vmem, size = 0x12000, scoped, tag = 'internal scratch']
  %s0 = inlined_call_operand.vmem [shape: bf16[16,64], index: 0, kind: input, shape index: {}]
  %s1 = inlined_call_operand.hbm [shape: bf16[64,128], index: 1, kind: input, shape index: {}]
  %s2 = inlined_call_operand.hbm [shape: bf16[128,128], index: 2, kind: input, shape index: {}]
  %s3 = inlined_call_operand.hbm [shape: bf16[128,128], index: 3, kind: input, shape index: {}]
  %s4 = inlined_call_operand.hbm [shape: bf16[128,128], index: 4, kind: input, shape index: {}]
  %s5 = inlined_call_operand.hbm [shape: bf16[128,128], index: 5, kind: input, shape index: {}]
  %s6 = inlined_call_operand.vmem [shape: f32[8,128], index: 6, kind: input, shape index: {}]
  %s7 = inlined_call_operand.vmem [shape: bf16[16,128], index: 7, kind: output, shape index: {}]
  %s8 = sld [smem:[#allocation0]]
  $region58: #{mlp_forward.1} parent=0
    _
  %s10 = ssub.s32 1, %s8
  %s11 = scalar_select 0, %s10, %s8
  $region1: #{mlp_forward.1} parent=0
    #allocation2 [shape = 'u8[16384]{0}', space=vmem, size = 0x4000, scoped, tag = 'input window, operand 1, single buffered']
    #allocation3 [shape = 's32[1]{0}', space=sflag, size = 0x4, scoped, tag = 'scoped memory for mlp_forward.1']
    #allocation4 [shape = 'u8[32768]{0}', space=vmem, size = 0x8000, scoped, tag = 'input window, operand 2, single buffered']
    #allocation5 [shape = 's32[1]{0}', space=sflag, size = 0x4, scoped, tag = 'scoped memory for mlp_forward.1']
    #allocation6 [shape = 'u8[32768]{0}', space=vmem, size = 0x8000, scoped, tag = 'input window, operand 3, single buffered']
    #allocation7 [shape = 'u8[32768]{0}', space=vmem, size = 0x8000, scoped, tag = 'input window, operand 4, single buffered']
    #allocation8 [shape = 's32[1]{0}', space=sflag, size = 0x4, scoped, tag = 'scoped memory for mlp_forward.1']
    #allocation9 [shape = 'u8[32768]{0}', space=vmem, size = 0x8000, scoped, tag = 'input window, operand 5, single buffered']
    %12 = vsyncpa [#allocation3], 0
    %13 = vsyncpa [#allocation5], 0
    %14 = vsyncpa [#allocation8], 0
    // Predicated region
    $region2: #{mlp_forward.1} parent=1 // pred_check
      _
    $region3: #{mlp_forward.1} parent=1 // pred_check_branch
      %16 = sbr.rel (0) target = $region5
    $region4: #{mlp_forward.1} parent=1 // pred_region
      _
    $region5: #{mlp_forward.1} parent=1 // pred_fallthru
      _
    // Predicated region
    $region6: #{mlp_forward.1} parent=1 // pred_check
      _
    $region7: #{mlp_forward.1} parent=1 // pred_check_branch
      %18 = sbr.rel (0) target = $region9
    $region8: #{mlp_forward.1} parent=1 // pred_region
      %s20 = ssub.s32 512, 512
      %21 = vsyncadd [#allocation3], %s20
      %s22 = sshll.u32 [#allocation2], 4
      %s23 = int_to_ptr.vmem [resolvable:$true] %s22
      %28 = dma.hbm_to_vmem [thread:$0]  %s1, 512, %s23, [#allocation3], 64, 64, 4
    $region9: #{mlp_forward.1} parent=1 // pred_fallthru
      _
    // Predicated region
    $region10: #{mlp_forward.1} parent=1 // pred_check
      _
    $region11: #{mlp_forward.1} parent=1 // pred_check_branch
      %30 = sbr.rel (0) target = $region13
    $region12: #{mlp_forward.1} parent=1 // pred_region
      %s32 = ssub.s32 1024, 1024
      %33 = vsyncadd [#allocation5], %s32
      %s34 = sshll.u32 [#allocation4], 4
      %s35 = int_to_ptr.vmem [resolvable:$true] %s34
      %40 = dma.hbm_to_vmem [thread:$0]  %s2, 1024, %s35, [#allocation5], 64, 64, 4
    $region13: #{mlp_forward.1} parent=1 // pred_fallthru
      _
    // Predicated region
    $region14: #{mlp_forward.1} parent=1 // pred_check
      _
    $region15: #{mlp_forward.1} parent=1 // pred_check_branch
      %42 = sbr.rel (0) target = $region17
    $region16: #{mlp_forward.1} parent=1 // pred_region
      %s44 = ssub.s32 1024, 1024
      %45 = vsyncadd [#allocation5], %s44
      %s46 = sshll.u32 [#allocation6], 4
      %s47 = int_to_ptr.vmem [resolvable:$true] %s46
      %52 = dma.hbm_to_vmem [thread:$0]  %s3, 1024, %s47, [#allocation5], 64, 64, 4
    $region17: #{mlp_forward.1} parent=1 // pred_fallthru
      _
    // Predicated region
    $region18: #{mlp_forward.1} parent=1 // pred_check
      _
    $region19: #{mlp_forward.1} parent=1 // pred_check_branch
      %54 = sbr.rel (0) target = $region21
    $region20: #{mlp_forward.1} parent=1 // pred_region
      %s56 = ssub.s32 1024, 1024
      %57 = vsyncadd [#allocation8], %s56
      %s58 = sshll.u32 [#allocation7], 4
      %s59 = int_to_ptr.vmem [resolvable:$true] %s58
      %64 = dma.hbm_to_vmem [thread:$0]  %s4, 1024, %s59, [#allocation8], 64, 64, 4
    $region21: #{mlp_forward.1} parent=1 // pred_fallthru
      _
    // Predicated region
    $region22: #{mlp_forward.1} parent=1 // pred_check
      _
    $region23: #{mlp_forward.1} parent=1 // pred_check_branch
      %66 = sbr.rel (0) target = $region25
    $region24: #{mlp_forward.1} parent=1 // pred_region
      %s68 = ssub.s32 1024, 1024
      %69 = vsyncadd [#allocation8], %s68
      %s70 = sshll.u32 [#allocation9], 4
      %s71 = int_to_ptr.vmem [resolvable:$true] %s70
      %76 = dma.hbm_to_vmem [thread:$0]  %s5, 1024, %s71, [#allocation8], 64, 64, 4
    $region25: #{mlp_forward.1} parent=1 // pred_fallthru
      _
    // Predicated region
    $region26: #{mlp_forward.1} parent=1 // pred_check
      _
    $region27: #{mlp_forward.1} parent=1 // pred_check_branch
      %78 = sbr.rel (0) target = $region29
    $region28: #{mlp_forward.1} parent=1 // pred_region
      _
    $region29: #{mlp_forward.1} parent=1 // pred_fallthru
      _
    // Predicated region
    $region30: #{mlp_forward.1} parent=1 // pred_check
      _
    $region31: #{mlp_forward.1} parent=1 // pred_check_branch
      %80 = sbr.rel (0) target = $region33
    $region32: #{mlp_forward.1} parent=1 // pred_region
      %81 = dma.done [#allocation3], 512
    $region33: #{mlp_forward.1} parent=1 // pred_fallthru
      _
    // Predicated region
    $region34: #{mlp_forward.1} parent=1 // pred_check
      _
    $region35: #{mlp_forward.1} parent=1 // pred_check_branch
      %83 = sbr.rel (0) target = $region37
    $region36: #{mlp_forward.1} parent=1 // pred_region
      %84 = dma.done [#allocation5], 1024
    $region37: #{mlp_forward.1} parent=1 // pred_fallthru
      _
    // Predicated region
    $region38: #{mlp_forward.1} parent=1 // pred_check
      _
    $region39: #{mlp_forward.1} parent=1 // pred_check_branch
      %86 = sbr.rel (0) target = $region41
    $region40: #{mlp_forward.1} parent=1 // pred_region
      %87 = dma.done [#allocation5], 1024
    $region41: #{mlp_forward.1} parent=1 // pred_fallthru
      _
    // Predicated region
    $region42: #{mlp_forward.1} parent=1 // pred_check
      _
    $region43: #{mlp_forward.1} parent=1 // pred_check_branch
      %89 = sbr.rel (0) target = $region45
    $region44: #{mlp_forward.1} parent=1 // pred_region
      %90 = dma.done [#allocation8], 1024
    $region45: #{mlp_forward.1} parent=1 // pred_fallthru
      _
    // Predicated region
    $region46: #{mlp_forward.1} parent=1 // pred_check
      _
    $region47: #{mlp_forward.1} parent=1 // pred_check_branch
      %92 = sbr.rel (0) target = $region49
    $region48: #{mlp_forward.1} parent=1 // pred_region
      %93 = dma.done [#allocation8], 1024
    $region49: #{mlp_forward.1} parent=1 // pred_fallthru
      _
    %v95 = vld [vmem:[%s0] sm:$0xf]
    %v96 = vld [vmem:[%s0 + $0x4] sm:$0xf]
    %v97 = vld [vmem:[%s6] sm:$0xff]
    %v98 = vld [vmem:[#allocation2] sm:$0xf]
    %v99 = vld [vmem:[#allocation2 + $0x4] sm:$0xf]
    %v100 = vld [vmem:[#allocation2 + $0x8] sm:$0xf]
    %v101 = vld [vmem:[#allocation2 + $0xc] sm:$0xf]
    %v102 = vld [vmem:[#allocation2 + $0x10] sm:$0xf]
    %v103 = vld [vmem:[#allocation2 + $0x14] sm:$0xf]
    %v104 = vld [vmem:[#allocation2 + $0x18] sm:$0xf]
    %v105 = vld [vmem:[#allocation2 + $0x1c] sm:$0xf]
    %v106 = vlaneseq
    %v107 = vshrl.u32 %v106, 7
    %v108 = vsub.s32 0, %v107
    %v109 = vrot.slane %v97, %v108
    %v112 = vunpack.c.l.b16 %v95
    %v113 = vunpack.c.l.b16 %v96
    %v114 = vpack.c.b16 %v113, %v112
    %v123 = vunpack.c.l.b16 %v98
    %v124 = vunpack.c.l.b16 %v99
    %v125 = vunpack.c.l.b16 %v100
    %v126 = vunpack.c.l.b16 %v101
    %v127 = vunpack.c.l.b16 %v102
    %v128 = vunpack.c.l.b16 %v103
    %v129 = vunpack.c.l.b16 %v104
    %v130 = vunpack.c.l.b16 %v105
    %v131 = vpack.c.b16 %v124, %v123
    %v132 = vpack.c.b16 %v126, %v125
    %v133 = vpack.c.b16 %v128, %v127
    %v134 = vpack.c.b16 %v130, %v129
    %vm139 = vcmask 523264
    %v141 = vsel %vm139, %v114, 0
    %143 = vmatprep.subr.bf16.mxu0 0
    %144 = vmatpush1.bf16.msra.mxu0 %v131
    %145 = vmatprep.subr.bf16.mxu0 0
    %146 = vmatpush1.bf16.msra.mxu0 %v132
    %147 = vmatprep.subr.bf16.mxu0 0
    %148 = vmatpush1.bf16.msra.mxu0 %v133
    %149 = vmatprep.subr.bf16.mxu0 0
    %150 = vmatpush1.bf16.msra.mxu0 %v134
    %151 = vmatprep.subr.bf16.mxu0 0
    %152 = vmatpush1.bf16.msra.mxu0 0
    %153 = vmatprep.subr.bf16.mxu0 0
    %154 = vmatpush1.bf16.msra.mxu0 0
    %155 = vmatprep.subr.bf16.mxu0 0
    %156 = vmatpush1.bf16.msra.mxu0 0
    %157 = vmatprep.subr.bf16.mxu0 0
    %158 = vmatpush1.bf16.msra.mxu0 0
    %159 = vmatprep.subr.bf16.mxu0 0
    %160 = vmatpush1.bf16.msra.mxu0 0
    %161 = vmatprep.subr.bf16.mxu0 0
    %162 = vmatpush1.bf16.msra.mxu0 0
    %163 = vmatprep.subr.bf16.mxu0 0
    %164 = vmatpush1.bf16.msra.mxu0 0
    %165 = vmatprep.subr.bf16.mxu0 0
    %166 = vmatpush1.bf16.msra.mxu0 0
    %167 = vmatprep.subr.bf16.mxu0 0
    %168 = vmatpush1.bf16.msra.mxu0 0
    %169 = vmatprep.subr.bf16.mxu0 0
    %170 = vmatpush1.bf16.msra.mxu0 0
    %171 = vmatprep.subr.bf16.mxu0 0
    %172 = vmatpush1.bf16.msra.mxu0 0
    %173 = vmatprep.subr.bf16.mxu0 0
    %174 = vmatpush1.bf16.msra.mxu0 0
    %175 = vmatprep.mubr.bf16.mxu0 0
    %176 = vmatmul.mubr.bf16.gmra.mrb[0].mxu0 %v141
    %v177 = vpop.f32.mrb[0].mxu0
    %v178 = vadd.f32 %v109, %v177
    %v179 = vpop.f32.mrb[0].mxu0
    %v180 = vpop.f32.mrb[0].mxu0
    %v181 = vadd.f32 %v109, %v180
    %v182 = vpop.f32.mrb[0].mxu0
    %183 = vdwg.mxu0
    %v184 = vmax.f32 %v178, 0.0
    %v185 = vmax.f32 %v181, 0.0
    %v186 = vpack.c.bf16 %v185, %v184
    %v187 = vld [vmem:[#allocation4] sm:$0xf]
    %v188 = vld [vmem:[#allocation4 + $0x4] sm:$0xf]
    %v189 = vld [vmem:[#allocation4 + $0x8] sm:$0xf]
    %v190 = vld [vmem:[#allocation4 + $0xc] sm:$0xf]
    %v191 = vld [vmem:[#allocation4 + $0x10] sm:$0xf]
    %v192 = vld [vmem:[#allocation4 + $0x14] sm:$0xf]
    %v193 = vld [vmem:[#allocation4 + $0x18] sm:$0xf]
    %v194 = vld [vmem:[#allocation4 + $0x1c] sm:$0xf]
    %v195 = vld [vmem:[#allocation4 + $0x20] sm:$0xf]
    %v196 = vld [vmem:[#allocation4 + $0x24] sm:$0xf]
    %v197 = vld [vmem:[#allocation4 + $0x28] sm:$0xf]
    %v198 = vld [vmem:[#allocation4 + $0x2c] sm:$0xf]
    %v199 = vld [vmem:[#allocation4 + $0x30] sm:$0xf]
    %v200 = vld [vmem:[#allocation4 + $0x34] sm:$0xf]
    %v201 = vld [vmem:[#allocation4 + $0x38] sm:$0xf]
    %v202 = vld [vmem:[#allocation4 + $0x3c] sm:$0xf]
    %v203 = vlaneseq
    %v204 = vshrl.u32 %v203, 7
    %v205 = vsub.s32 1, %v204
    %v206 = vrot.slane %v97, %v205
    %v223 = vunpack.c.l.b16 %v187
    %v224 = vunpack.c.l.b16 %v188
    %v225 = vunpack.c.l.b16 %v189
    %v226 = vunpack.c.l.b16 %v190
    %v227 = vunpack.c.l.b16 %v191
    %v228 = vunpack.c.l.b16 %v192
    %v229 = vunpack.c.l.b16 %v193
    %v230 = vunpack.c.l.b16 %v194
    %v231 = vunpack.c.l.b16 %v195
    %v232 = vunpack.c.l.b16 %v196
    %v233 = vunpack.c.l.b16 %v197
    %v234 = vunpack.c.l.b16 %v198
    %v235 = vunpack.c.l.b16 %v199
    %v236 = vunpack.c.l.b16 %v200
    %v237 = vunpack.c.l.b16 %v201
    %v238 = vunpack.c.l.b16 %v202
    %v239 = vpack.c.b16 %v224, %v223
    %v240 = vpack.c.b16 %v226, %v225
    %v241 = vpack.c.b16 %v228, %v227
    %v242 = vpack.c.b16 %v230, %v229
    %v243 = vpack.c.b16 %v232, %v231
    %v244 = vpack.c.b16 %v234, %v233
    %v245 = vpack.c.b16 %v236, %v235
    %v246 = vpack.c.b16 %v238, %v237
    %255 = vmatprep.subr.bf16.mxu0 0
    %256 = vmatpush1.bf16.msra.mxu0 %v239
    %257 = vmatprep.subr.bf16.mxu0 0
    %258 = vmatpush1.bf16.msra.mxu0 %v240
    %259 = vmatprep.subr.bf16.mxu0 0
    %260 = vmatpush1.bf16.msra.mxu0 %v241
    %261 = vmatprep.subr.bf16.mxu0 0
    %262 = vmatpush1.bf16.msra.mxu0 %v242
    %263 = vmatprep.subr.bf16.mxu0 0
    %264 = vmatpush1.bf16.msra.mxu0 %v243
    %265 = vmatprep.subr.bf16.mxu0 0
    %266 = vmatpush1.bf16.msra.mxu0 %v244
    %267 = vmatprep.subr.bf16.mxu0 0
    %268 = vmatpush1.bf16.msra.mxu0 %v245
    %269 = vmatprep.subr.bf16.mxu0 0
    %270 = vmatpush1.bf16.msra.mxu0 %v246
    %271 = vmatprep.subr.bf16.mxu0 0
    %272 = vmatpush1.bf16.msra.mxu0 0
    %273 = vmatprep.subr.bf16.mxu0 0
    %274 = vmatpush1.bf16.msra.mxu0 0
    %275 = vmatprep.subr.bf16.mxu0 0
    %276 = vmatpush1.bf16.msra.mxu0 0
    %277 = vmatprep.subr.bf16.mxu0 0
    %278 = vmatpush1.bf16.msra.mxu0 0
    %279 = vmatprep.subr.bf16.mxu0 0
    %280 = vmatpush1.bf16.msra.mxu0 0
    %281 = vmatprep.subr.bf16.mxu0 0
    %282 = vmatpush1.bf16.msra.mxu0 0
    %283 = vmatprep.subr.bf16.mxu0 0
    %284 = vmatpush1.bf16.msra.mxu0 0
    %285 = vmatprep.subr.bf16.mxu0 0
    %286 = vmatpush1.bf16.msra.mxu0 0
    %287 = vmatprep.mubr.bf16.mxu0 0
    %288 = vmatmul.mubr.bf16.gmra.mrb[0].mxu0 %v186
    %v289 = vpop.f32.mrb[0].mxu0
    %v290 = vadd.f32 %v206, %v289
    %v291 = vpop.f32.mrb[0].mxu0
    %v292 = vpop.f32.mrb[0].mxu0
    %v293 = vadd.f32 %v206, %v292
    %v294 = vpop.f32.mrb[0].mxu0
    %295 = vdwg.mxu0
    %v296 = vmax.f32 %v290, 0.0
    %v297 = vmax.f32 %v293, 0.0
    %v298 = vpack.c.bf16 %v297, %v296
    %v299 = vld [vmem:[#allocation6] sm:$0xf]
    %v300 = vld [vmem:[#allocation6 + $0x4] sm:$0xf]
    %v301 = vld [vmem:[#allocation6 + $0x8] sm:$0xf]
    %v302 = vld [vmem:[#allocation6 + $0xc] sm:$0xf]
    %v303 = vld [vmem:[#allocation6 + $0x10] sm:$0xf]
    %v304 = vld [vmem:[#allocation6 + $0x14] sm:$0xf]
    %v305 = vld [vmem:[#allocation6 + $0x18] sm:$0xf]
    %v306 = vld [vmem:[#allocation6 + $0x1c] sm:$0xf]
    %v307 = vld [vmem:[#allocation6 + $0x20] sm:$0xf]
    %v308 = vld [vmem:[#allocation6 + $0x24] sm:$0xf]
    %v309 = vld [vmem:[#allocation6 + $0x28] sm:$0xf]
    %v310 = vld [vmem:[#allocation6 + $0x2c] sm:$0xf]
    %v311 = vld [vmem:[#allocation6 + $0x30] sm:$0xf]
    %v312 = vld [vmem:[#allocation6 + $0x34] sm:$0xf]
    %v313 = vld [vmem:[#allocation6 + $0x38] sm:$0xf]
    %v314 = vld [vmem:[#allocation6 + $0x3c] sm:$0xf]
    %v315 = vlaneseq
    %v316 = vshrl.u32 %v315, 7
    %v317 = vsub.s32 2, %v316
    %v318 = vrot.slane %v97, %v317
    %v335 = vunpack.c.l.b16 %v299
    %v336 = vunpack.c.l.b16 %v300
    %v337 = vunpack.c.l.b16 %v301
    %v338 = vunpack.c.l.b16 %v302
    %v339 = vunpack.c.l.b16 %v303
    %v340 = vunpack.c.l.b16 %v304
    %v341 = vunpack.c.l.b16 %v305
    %v342 = vunpack.c.l.b16 %v306
    %v343 = vunpack.c.l.b16 %v307
    %v344 = vunpack.c.l.b16 %v308
    %v345 = vunpack.c.l.b16 %v309
    %v346 = vunpack.c.l.b16 %v310
    %v347 = vunpack.c.l.b16 %v311
    %v348 = vunpack.c.l.b16 %v312
    %v349 = vunpack.c.l.b16 %v313
    %v350 = vunpack.c.l.b16 %v314
    %v351 = vpack.c.b16 %v336, %v335
    %v352 = vpack.c.b16 %v338, %v337
    %v353 = vpack.c.b16 %v340, %v339
    %v354 = vpack.c.b16 %v342, %v341
    %v355 = vpack.c.b16 %v344, %v343
    %v356 = vpack.c.b16 %v346, %v345
    %v357 = vpack.c.b16 %v348, %v347
    %v358 = vpack.c.b16 %v350, %v349
    %367 = vmatprep.subr.bf16.mxu0 0
    %368 = vmatpush1.bf16.msra.mxu0 %v351
    %369 = vmatprep.subr.bf16.mxu0 0
    %370 = vmatpush1.bf16.msra.mxu0 %v352
    %371 = vmatprep.subr.bf16.mxu0 0
    %372 = vmatpush1.bf16.msra.mxu0 %v353
    %373 = vmatprep.subr.bf16.mxu0 0
    %374 = vmatpush1.bf16.msra.mxu0 %v354
    %375 = vmatprep.subr.bf16.mxu0 0
    %376 = vmatpush1.bf16.msra.mxu0 %v355
    %377 = vmatprep.subr.bf16.mxu0 0
    %378 = vmatpush1.bf16.msra.mxu0 %v356
    %379 = vmatprep.subr.bf16.mxu0 0
    %380 = vmatpush1.bf16.msra.mxu0 %v357
    %381 = vmatprep.subr.bf16.mxu0 0
    %382 = vmatpush1.bf16.msra.mxu0 %v358
    %383 = vmatprep.subr.bf16.mxu0 0
    %384 = vmatpush1.bf16.msra.mxu0 0
    %385 = vmatprep.subr.bf16.mxu0 0
    %386 = vmatpush1.bf16.msra.mxu0 0
    %387 = vmatprep.subr.bf16.mxu0 0
    %388 = vmatpush1.bf16.msra.mxu0 0
    %389 = vmatprep.subr.bf16.mxu0 0
    %390 = vmatpush1.bf16.msra.mxu0 0
    %391 = vmatprep.subr.bf16.mxu0 0
    %392 = vmatpush1.bf16.msra.mxu0 0
    %393 = vmatprep.subr.bf16.mxu0 0
    %394 = vmatpush1.bf16.msra.mxu0 0
    %395 = vmatprep.subr.bf16.mxu0 0
    %396 = vmatpush1.bf16.msra.mxu0 0
    %397 = vmatprep.subr.bf16.mxu0 0
    %398 = vmatpush1.bf16.msra.mxu0 0
    %399 = vmatprep.mubr.bf16.mxu0 0
    %400 = vmatmul.mubr.bf16.gmra.mrb[0].mxu0 %v298
    %v401 = vpop.f32.mrb[0].mxu0
    %v402 = vadd.f32 %v318, %v401
    %v403 = vpop.f32.mrb[0].mxu0
    %v404 = vpop.f32.mrb[0].mxu0
    %v405 = vadd.f32 %v318, %v404
    %v406 = vpop.f32.mrb[0].mxu0
    %407 = vdwg.mxu0
    %v408 = vmax.f32 %v402, 0.0
    %v409 = vmax.f32 %v405, 0.0
    %v410 = vpack.c.bf16 %v409, %v408
    %v411 = vld [vmem:[#allocation7] sm:$0xf]
    %v412 = vld [vmem:[#allocation7 + $0x4] sm:$0xf]
    %v413 = vld [vmem:[#allocation7 + $0x8] sm:$0xf]
    %v414 = vld [vmem:[#allocation7 + $0xc] sm:$0xf]
    %v415 = vld [vmem:[#allocation7 + $0x10] sm:$0xf]
    %v416 = vld [vmem:[#allocation7 + $0x14] sm:$0xf]
    %v417 = vld [vmem:[#allocation7 + $0x18] sm:$0xf]
    %v418 = vld [vmem:[#allocation7 + $0x1c] sm:$0xf]
    %v419 = vld [vmem:[#allocation7 + $0x20] sm:$0xf]
    %v420 = vld [vmem:[#allocation7 + $0x24] sm:$0xf]
    %v421 = vld [vmem:[#allocation7 + $0x28] sm:$0xf]
    %v422 = vld [vmem:[#allocation7 + $0x2c] sm:$0xf]
    %v423 = vld [vmem:[#allocation7 + $0x30] sm:$0xf]
    %v424 = vld [vmem:[#allocation7 + $0x34] sm:$0xf]
    %v425 = vld [vmem:[#allocation7 + $0x38] sm:$0xf]
    %v426 = vld [vmem:[#allocation7 + $0x3c] sm:$0xf]
    %v427 = vlaneseq
    %v428 = vshrl.u32 %v427, 7
    %v429 = vsub.s32 3, %v428
    %v430 = vrot.slane %v97, %v429
    %v447 = vunpack.c.l.b16 %v411
    %v448 = vunpack.c.l.b16 %v412
    %v449 = vunpack.c.l.b16 %v413
    %v450 = vunpack.c.l.b16 %v414
    %v451 = vunpack.c.l.b16 %v415
    %v452 = vunpack.c.l.b16 %v416
    %v453 = vunpack.c.l.b16 %v417
    %v454 = vunpack.c.l.b16 %v418
    %v455 = vunpack.c.l.b16 %v419
    %v456 = vunpack.c.l.b16 %v420
    %v457 = vunpack.c.l.b16 %v421
    %v458 = vunpack.c.l.b16 %v422
    %v459 = vunpack.c.l.b16 %v423
    %v460 = vunpack.c.l.b16 %v424
    %v461 = vunpack.c.l.b16 %v425
    %v462 = vunpack.c.l.b16 %v426
    %v463 = vpack.c.b16 %v448, %v447
    %v464 = vpack.c.b16 %v450, %v449
    %v465 = vpack.c.b16 %v452, %v451
    %v466 = vpack.c.b16 %v454, %v453
    %v467 = vpack.c.b16 %v456, %v455
    %v468 = vpack.c.b16 %v458, %v457
    %v469 = vpack.c.b16 %v460, %v459
    %v470 = vpack.c.b16 %v462, %v461
    %479 = vmatprep.subr.bf16.mxu0 0
    %480 = vmatpush1.bf16.msra.mxu0 %v463
    %481 = vmatprep.subr.bf16.mxu0 0
    %482 = vmatpush1.bf16.msra.mxu0 %v464
    %483 = vmatprep.subr.bf16.mxu0 0
    %484 = vmatpush1.bf16.msra.mxu0 %v465
    %485 = vmatprep.subr.bf16.mxu0 0
    %486 = vmatpush1.bf16.msra.mxu0 %v466
    %487 = vmatprep.subr.bf16.mxu0 0
    %488 = vmatpush1.bf16.msra.mxu0 %v467
    %489 = vmatprep.subr.bf16.mxu0 0
    %490 = vmatpush1.bf16.msra.mxu0 %v468
    %491 = vmatprep.subr.bf16.mxu0 0
    %492 = vmatpush1.bf16.msra.mxu0 %v469
    %493 = vmatprep.subr.bf16.mxu0 0
    %494 = vmatpush1.bf16.msra.mxu0 %v470
    %495 = vmatprep.subr.bf16.mxu0 0
    %496 = vmatpush1.bf16.msra.mxu0 0
    %497 = vmatprep.subr.bf16.mxu0 0
    %498 = vmatpush1.bf16.msra.mxu0 0
    %499 = vmatprep.subr.bf16.mxu0 0
    %500 = vmatpush1.bf16.msra.mxu0 0
    %501 = vmatprep.subr.bf16.mxu0 0
    %502 = vmatpush1.bf16.msra.mxu0 0
    %503 = vmatprep.subr.bf16.mxu0 0
    %504 = vmatpush1.bf16.msra.mxu0 0
    %505 = vmatprep.subr.bf16.mxu0 0
    %506 = vmatpush1.bf16.msra.mxu0 0
    %507 = vmatprep.subr.bf16.mxu0 0
    %508 = vmatpush1.bf16.msra.mxu0 0
    %509 = vmatprep.subr.bf16.mxu0 0
    %510 = vmatpush1.bf16.msra.mxu0 0
    %511 = vmatprep.mubr.bf16.mxu0 0
    %512 = vmatmul.mubr.bf16.gmra.mrb[0].mxu0 %v410
    %v513 = vpop.f32.mrb[0].mxu0
    %v514 = vadd.f32 %v430, %v513
    %v515 = vpop.f32.mrb[0].mxu0
    %v516 = vpop.f32.mrb[0].mxu0
    %v517 = vadd.f32 %v430, %v516
    %v518 = vpop.f32.mrb[0].mxu0
    %519 = vdwg.mxu0
    %v520 = vmax.f32 %v514, 0.0
    %v521 = vmax.f32 %v517, 0.0
    %v522 = vpack.c.bf16 %v521, %v520
    %v523 = vld [vmem:[#allocation9] sm:$0xf]
    %v524 = vld [vmem:[#allocation9 + $0x4] sm:$0xf]
    %v525 = vld [vmem:[#allocation9 + $0x8] sm:$0xf]
    %v526 = vld [vmem:[#allocation9 + $0xc] sm:$0xf]
    %v527 = vld [vmem:[#allocation9 + $0x10] sm:$0xf]
    %v528 = vld [vmem:[#allocation9 + $0x14] sm:$0xf]
    %v529 = vld [vmem:[#allocation9 + $0x18] sm:$0xf]
    %v530 = vld [vmem:[#allocation9 + $0x1c] sm:$0xf]
    %v531 = vld [vmem:[#allocation9 + $0x20] sm:$0xf]
    %v532 = vld [vmem:[#allocation9 + $0x24] sm:$0xf]
    %v533 = vld [vmem:[#allocation9 + $0x28] sm:$0xf]
    %v534 = vld [vmem:[#allocation9 + $0x2c] sm:$0xf]
    %v535 = vld [vmem:[#allocation9 + $0x30] sm:$0xf]
    %v536 = vld [vmem:[#allocation9 + $0x34] sm:$0xf]
    %v537 = vld [vmem:[#allocation9 + $0x38] sm:$0xf]
    %v538 = vld [vmem:[#allocation9 + $0x3c] sm:$0xf]
    %v539 = vlaneseq
    %v540 = vshrl.u32 %v539, 7
    %v541 = vsub.s32 4, %v540
    %v542 = vrot.slane %v97, %v541
    %v559 = vunpack.c.l.b16 %v523
    %v560 = vunpack.c.l.b16 %v524
    %v561 = vunpack.c.l.b16 %v525
    %v562 = vunpack.c.l.b16 %v526
    %v563 = vunpack.c.l.b16 %v527
    %v564 = vunpack.c.l.b16 %v528
    %v565 = vunpack.c.l.b16 %v529
    %v566 = vunpack.c.l.b16 %v530
    %v567 = vunpack.c.l.b16 %v531
    %v568 = vunpack.c.l.b16 %v532
    %v569 = vunpack.c.l.b16 %v533
    %v570 = vunpack.c.l.b16 %v534
    %v571 = vunpack.c.l.b16 %v535
    %v572 = vunpack.c.l.b16 %v536
    %v573 = vunpack.c.l.b16 %v537
    %v574 = vunpack.c.l.b16 %v538
    %v575 = vpack.c.b16 %v560, %v559
    %v576 = vpack.c.b16 %v562, %v561
    %v577 = vpack.c.b16 %v564, %v563
    %v578 = vpack.c.b16 %v566, %v565
    %v579 = vpack.c.b16 %v568, %v567
    %v580 = vpack.c.b16 %v570, %v569
    %v581 = vpack.c.b16 %v572, %v571
    %v582 = vpack.c.b16 %v574, %v573
    %591 = vmatprep.subr.bf16.mxu0 0
    %592 = vmatpush1.bf16.msra.mxu0 %v575
    %593 = vmatprep.subr.bf16.mxu0 0
    %594 = vmatpush1.bf16.msra.mxu0 %v576
    %595 = vmatprep.subr.bf16.mxu0 0
    %596 = vmatpush1.bf16.msra.mxu0 %v577
    %597 = vmatprep.subr.bf16.mxu0 0
    %598 = vmatpush1.bf16.msra.mxu0 %v578
    %599 = vmatprep.subr.bf16.mxu0 0
    %600 = vmatpush1.bf16.msra.mxu0 %v579
    %601 = vmatprep.subr.bf16.mxu0 0
    %602 = vmatpush1.bf16.msra.mxu0 %v580
    %603 = vmatprep.subr.bf16.mxu0 0
    %604 = vmatpush1.bf16.msra.mxu0 %v581
    %605 = vmatprep.subr.bf16.mxu0 0
    %606 = vmatpush1.bf16.msra.mxu0 %v582
    %607 = vmatprep.subr.bf16.mxu0 0
    %608 = vmatpush1.bf16.msra.mxu0 0
    %609 = vmatprep.subr.bf16.mxu0 0
    %610 = vmatpush1.bf16.msra.mxu0 0
    %611 = vmatprep.subr.bf16.mxu0 0
    %612 = vmatpush1.bf16.msra.mxu0 0
    %613 = vmatprep.subr.bf16.mxu0 0
    %614 = vmatpush1.bf16.msra.mxu0 0
    %615 = vmatprep.subr.bf16.mxu0 0
    %616 = vmatpush1.bf16.msra.mxu0 0
    %617 = vmatprep.subr.bf16.mxu0 0
    %618 = vmatpush1.bf16.msra.mxu0 0
    %619 = vmatprep.subr.bf16.mxu0 0
    %620 = vmatpush1.bf16.msra.mxu0 0
    %621 = vmatprep.subr.bf16.mxu0 0
    %622 = vmatpush1.bf16.msra.mxu0 0
    %623 = vmatprep.mubr.bf16.mxu0 0
    %624 = vmatmul.mubr.bf16.gmra.mrb[0].mxu0 %v522
    %v625 = vpop.f32.mrb[0].mxu0
    %v626 = vadd.f32 %v542, %v625
    %v627 = vpop.f32.mrb[0].mxu0
    %v628 = vpop.f32.mrb[0].mxu0
    %v629 = vadd.f32 %v542, %v628
    %v630 = vpop.f32.mrb[0].mxu0
    %631 = vdwg.mxu0
    %v632 = vpack.c.bf16 %v629, %v626
    %v634 = vunpack.c.l.b16 %v632
    %v635 = vunpack.c.h.b16 %v632
    %v636 = vpack.c.b16 %v634, %v634
    %v637 = vpack.c.b16 %v635, %v635
    %640 = vst [vmem:[%s7] sm:$0xf] %v636
    %641 = vst [vmem:[%s7 + $0x4] sm:$0xf] %v637
    // Predicated region
    $region50: #{mlp_forward.1} parent=1 // pred_check
      _
    $region51: #{mlp_forward.1} parent=1 // pred_check_branch
      %643 = sbr.rel (0) target = $region53
    $region52: #{mlp_forward.1} parent=1 // pred_region
      _
    $region53: #{mlp_forward.1} parent=1 // pred_fallthru
      _
    // Predicated region
    $region54: #{mlp_forward.1} parent=1 // pred_check
      _
    $region55: #{mlp_forward.1} parent=1 // pred_check_branch
      %645 = sbr.rel (0) target = $region57
    $region56: #{mlp_forward.1} parent=1 // pred_region
      _
    $region57: #{mlp_forward.1} parent=1 // pred_fallthru
      _
    %646 = vsyncpa [#allocation3], 1
    %647 = vsyncpa [#allocation5], 1
    %648 = vsyncpa [#allocation8], 1

</llo_original>
